<compile_context>
chip_gen: v5e
topology: v5e:2x2
jax: 0.10.0
libtpu: 0.0.40
codegen_flags: <defaults>
</compile_context>

<pallas_src>
import math
import functools

import jax
import jax.numpy as jnp
from jax.experimental import pallas as pl
from jax.experimental.pallas import tpu as pltpu


def _ctrnn_kernel(alpha, seq_len, batch, batch_pad, hidden_size):
    one_minus_alpha = 1.0 - alpha

    def kernel(x_ref, win_ref, whh_ref, bias_ref, out_ref, hfin_ref):
        # Hoisted input projection for ALL time steps at once:
        #   proj[t*batch_pad + b, :] = x[t, b, :] @ W_in^T + (b_in + b_hh)
        proj = (jnp.dot(x_ref[...], win_ref[...],
                        preferred_element_type=jnp.float32)
                + bias_ref[...])                         # (seq*batch_pad, hidden)

        w_hh = whh_ref[...]                              # (hidden, hidden)
        h = jnp.zeros((batch_pad, hidden_size), jnp.float32)

        # Static unroll over time; `h` is a pure value carry (vreg-resident).
        for t in range(seq_len):
            # 8-sublane-aligned, full-vreg slice of the hoisted projection.
            p_t = proj[t * batch_pad:(t + 1) * batch_pad, :]
            h_new = jnp.maximum(
                p_t + jnp.dot(h, w_hh, preferred_element_type=jnp.float32),
                0.0)                                     # relu
            h = h * one_minus_alpha + h_new * alpha      # leaky integration
            # Per-step store straight into the final (seq, batch, hidden)
            # layout; only the real batch rows are written.
            out_ref[t] = h[:batch, :].astype(out_ref.dtype)

        hfin_ref[...] = h[:batch, :].astype(hfin_ref.dtype)

    return kernel


def _ctrnn_forward_impl(x, w_in_t, b_in, w_hh_t, b_hh, alpha):
    """x: (seq, batch, input); w_in_t: (input, hidden); w_hh_t: (hidden, hidden).

    Returns (output (seq, batch, hidden), final hidden (batch, hidden))."""
    seq_len, batch, input_size = x.shape
    hidden_size = w_in_t.shape[1]

    # Pad batch up to a multiple of 8 sublanes (zero rows); padded rows never
    # influence the real rows (matmul is row-independent in the LHS) and are
    # never stored back.
    batch_pad = ((batch + 7) // 8) * 8
    if batch_pad != batch:
        x = jnp.pad(x, ((0, 0), (0, batch_pad - batch), (0, 0)))

    # Flatten time into rows so the input projection is one matmul; fold the
    # two biases into a single broadcast operand.
    x2d = x.reshape(seq_len * batch_pad, input_size)
    bias = (b_in + b_hh).reshape(1, hidden_size)

    vmem = pl.BlockSpec(memory_space=pltpu.MemorySpace.VMEM)
    out, h_fin = pl.pallas_call(
        _ctrnn_kernel(alpha, seq_len, batch, batch_pad, hidden_size),
        out_shape=(
            jax.ShapeDtypeStruct((seq_len, batch, hidden_size), jnp.float32),
            jax.ShapeDtypeStruct((batch, hidden_size), jnp.float32),
        ),
        in_specs=[vmem, vmem, vmem, vmem],
        out_specs=(vmem, vmem),
    )(x2d, w_in_t, w_hh_t, bias)
    return out, h_fin


# One dispatch for the whole forward (pad + bias fold + kernel).
ctrnn_forward = jax.jit(_ctrnn_forward_impl, static_argnums=(5,))


def ctrnn_reference(x, w_in_t, b_in, w_hh_t, b_hh, alpha):
    """Pure-JAX reference matching the PyTorch forward."""
    seq_len, batch, _ = x.shape
    hidden_size = w_in_t.shape[1]
    h = jnp.zeros((batch, hidden_size), jnp.float32)

    def step(h, x_t):
        h_new = jax.nn.relu(x_t @ w_in_t + b_in + h @ w_hh_t + b_hh)
        h = h * (1.0 - alpha) + h_new * alpha
        return h, h

    h_fin, out = jax.lax.scan(step, h, x)
    return out, h_fin


if __name__ == "__main__":
    # Problem sizes consistent with the module's forward.
    seq_len, batch = 8, 2
    input_size, hidden_size = 4, 32
    dt, tau = 20.0, 100.0
    alpha = dt / tau

    key = jax.random.PRNGKey(0)
    k_x, k_wi, k_bi, k_wh, k_bh = jax.random.split(key, 5)

    # Deterministic PyTorch-Linear-style init: U(-1/sqrt(fan_in), 1/sqrt(fan_in)).
    bound_i = 1.0 / math.sqrt(input_size)
    bound_h = 1.0 / math.sqrt(hidden_size)
    w_in_t = jax.random.uniform(k_wi, (input_size, hidden_size), jnp.float32,
                                -bound_i, bound_i)       # input2h.weight.T
    b_in = jax.random.uniform(k_bi, (hidden_size,), jnp.float32,
                              -bound_i, bound_i)
    w_hh_t = jax.random.uniform(k_wh, (hidden_size, hidden_size), jnp.float32,
                                -bound_h, bound_h)       # h2h.weight.T
    b_hh = jax.random.uniform(k_bh, (hidden_size,), jnp.float32,
                              -bound_h, bound_h)

    x = jax.random.normal(k_x, (seq_len, batch, input_size), jnp.float32)

    out, h_fin = ctrnn_forward(x, w_in_t, b_in, w_hh_t, b_hh, alpha)
    out = jax.block_until_ready(out)
    h_fin = jax.block_until_ready(h_fin)

    out_ref, h_ref = ctrnn_reference(x, w_in_t, b_in, w_hh_t, b_hh, alpha)
    assert out.shape == (seq_len, batch, hidden_size)
    assert h_fin.shape == (batch, hidden_size)
    assert jnp.allclose(out, out_ref, atol=1e-5, rtol=1e-5)
    assert jnp.allclose(h_fin, h_ref, atol=1e-5, rtol=1e-5)

    print("KERNEL_OK")
</pallas_src>

<mosaic_0001>
module attributes {stable_mosaic.version = 11 : i64} {
  func.func @kernel(%arg0: memref<64x4xf32, #tpu.memory_space<vmem>>, %arg1: memref<4x32xf32, #tpu.memory_space<vmem>>, %arg2: memref<32x32xf32, #tpu.memory_space<vmem>>, %arg3: memref<1x32xf32, #tpu.memory_space<vmem>>, %arg4: memref<8x2x32xf32, #tpu.memory_space<vmem>>, %arg5: memref<2x32xf32, #tpu.memory_space<vmem>>) attributes {dimension_semantics = [], scalar_prefetch = 0 : i64, scratch_operands = 0 : i64, tpu.core_type = #tpu.core_type<tc>} {
    %c0 = arith.constant 0 : index
    %c0_0 = arith.constant 0 : index
    %0 = vector.load %arg0[%c0, %c0_0] : memref<64x4xf32, #tpu.memory_space<vmem>>, vector<64x4xf32>
    %c0_1 = arith.constant 0 : index
    %c0_2 = arith.constant 0 : index
    %1 = vector.load %arg1[%c0_1, %c0_2] : memref<4x32xf32, #tpu.memory_space<vmem>>, vector<4x32xf32>
    %cst = arith.constant dense<0.000000e+00> : vector<64x32xf32>
    %2 = tpu.matmul %0, %1, %cst {dimension_numbers = #tpu.dot_dimension_numbers<[1], [0], [0], [1], [0, 0, 1, 1], [], []>} : vector<64x4xf32>, vector<4x32xf32>, vector<64x32xf32> -> vector<64x32xf32>
    %c0_3 = arith.constant 0 : index
    %c0_4 = arith.constant 0 : index
    %3 = vector.load %arg3[%c0_3, %c0_4] : memref<1x32xf32, #tpu.memory_space<vmem>>, vector<1x32xf32>
    %4 = vector.broadcast %3 : vector<1x32xf32> to vector<64x32xf32>
    %5 = arith.addf %2, %4 : vector<64x32xf32>
    %c0_5 = arith.constant 0 : index
    %c0_6 = arith.constant 0 : index
    %6 = vector.load %arg2[%c0_5, %c0_6] : memref<32x32xf32, #tpu.memory_space<vmem>>, vector<32x32xf32>
    %cst_7 = arith.constant 0.000000e+00 : f32
    %7 = vector.broadcast %cst_7 : f32 to vector<8x32xf32>
    %8 = vector.extract_strided_slice %5 {offsets = [0, 0], sizes = [8, 32], strides = [1, 1]} : vector<64x32xf32> to vector<8x32xf32>
    %cst_8 = arith.constant dense<0.000000e+00> : vector<8x32xf32>
    %9 = tpu.matmul %7, %6, %cst_8 {dimension_numbers = #tpu.dot_dimension_numbers<[1], [0], [0], [1], [0, 0, 1, 1], [], []>} : vector<8x32xf32>, vector<32x32xf32>, vector<8x32xf32> -> vector<8x32xf32>
    %10 = arith.addf %8, %9 : vector<8x32xf32>
    %cst_9 = arith.constant 0.000000e+00 : f32
    %11 = vector.broadcast %cst_9 : f32 to vector<8x32xf32>
    %12 = arith.maximumf %10, %11 : vector<8x32xf32>
    %cst_10 = arith.constant 8.000000e-01 : f32
    %13 = vector.broadcast %cst_10 : f32 to vector<8x32xf32>
    %14 = arith.mulf %7, %13 : vector<8x32xf32>
    %cst_11 = arith.constant 2.000000e-01 : f32
    %15 = vector.broadcast %cst_11 : f32 to vector<8x32xf32>
    %16 = arith.mulf %12, %15 : vector<8x32xf32>
    %17 = arith.addf %14, %16 : vector<8x32xf32>
    %18 = vector.extract_strided_slice %17 {offsets = [0, 0], sizes = [2, 32], strides = [1, 1]} : vector<8x32xf32> to vector<2x32xf32>
    %c0_12 = arith.constant 0 : index
    %c0_13 = arith.constant 0 : index
    %c0_14 = arith.constant 0 : index
    %19 = vector.load %arg4[%c0_12, %c0_13, %c0_14] : memref<8x2x32xf32, #tpu.memory_space<vmem>>, vector<1x2x32xf32>
    %20 = vector.shape_cast %19 : vector<1x2x32xf32> to vector<2x32xf32>
    %21 = vector.shape_cast %18 : vector<2x32xf32> to vector<1x2x32xf32>
    tpu.vector_store %arg4[%c0_12, %c0_13, %c0_14], %21 {strides = array<i32>} : memref<8x2x32xf32, #tpu.memory_space<vmem>>, vector<1x2x32xf32>,
    %22 = vector.extract_strided_slice %5 {offsets = [8, 0], sizes = [8, 32], strides = [1, 1]} : vector<64x32xf32> to vector<8x32xf32>
    %cst_15 = arith.constant dense<0.000000e+00> : vector<8x32xf32>
    %23 = tpu.matmul %17, %6, %cst_15 {dimension_numbers = #tpu.dot_dimension_numbers<[1], [0], [0], [1], [0, 0, 1, 1], [], []>} : vector<8x32xf32>, vector<32x32xf32>, vector<8x32xf32> -> vector<8x32xf32>
    %24 = arith.addf %22, %23 : vector<8x32xf32>
    %cst_16 = arith.constant 0.000000e+00 : f32
    %25 = vector.broadcast %cst_16 : f32 to vector<8x32xf32>
    %26 = arith.maximumf %24, %25 : vector<8x32xf32>
    %cst_17 = arith.constant 8.000000e-01 : f32
    %27 = vector.broadcast %cst_17 : f32 to vector<8x32xf32>
    %28 = arith.mulf %17, %27 : vector<8x32xf32>
    %cst_18 = arith.constant 2.000000e-01 : f32
    %29 = vector.broadcast %cst_18 : f32 to vector<8x32xf32>
    %30 = arith.mulf %26, %29 : vector<8x32xf32>
    %31 = arith.addf %28, %30 : vector<8x32xf32>
    %32 = vector.extract_strided_slice %31 {offsets = [0, 0], sizes = [2, 32], strides = [1, 1]} : vector<8x32xf32> to vector<2x32xf32>
    %c1 = arith.constant 1 : index
    %c0_19 = arith.constant 0 : index
    %c0_20 = arith.constant 0 : index
    %33 = vector.load %arg4[%c1, %c0_19, %c0_20] : memref<8x2x32xf32, #tpu.memory_space<vmem>>, vector<1x2x32xf32>
    %34 = vector.shape_cast %33 : vector<1x2x32xf32> to vector<2x32xf32>
    %35 = vector.shape_cast %32 : vector<2x32xf32> to vector<1x2x32xf32>
    tpu.vector_store %arg4[%c1, %c0_19, %c0_20], %35 {strides = array<i32>} : memref<8x2x32xf32, #tpu.memory_space<vmem>>, vector<1x2x32xf32>,
    %36 = vector.extract_strided_slice %5 {offsets = [16, 0], sizes = [8, 32], strides = [1, 1]} : vector<64x32xf32> to vector<8x32xf32>
    %cst_21 = arith.constant dense<0.000000e+00> : vector<8x32xf32>
    %37 = tpu.matmul %31, %6, %cst_21 {dimension_numbers = #tpu.dot_dimension_numbers<[1], [0], [0], [1], [0, 0, 1, 1], [], []>} : vector<8x32xf32>, vector<32x32xf32>, vector<8x32xf32> -> vector<8x32xf32>
    %38 = arith.addf %36, %37 : vector<8x32xf32>
    %cst_22 = arith.constant 0.000000e+00 : f32
    %39 = vector.broadcast %cst_22 : f32 to vector<8x32xf32>
    %40 = arith.maximumf %38, %39 : vector<8x32xf32>
    %cst_23 = arith.constant 8.000000e-01 : f32
    %41 = vector.broadcast %cst_23 : f32 to vector<8x32xf32>
    %42 = arith.mulf %31, %41 : vector<8x32xf32>
    %cst_24 = arith.constant 2.000000e-01 : f32
    %43 = vector.broadcast %cst_24 : f32 to vector<8x32xf32>
    %44 = arith.mulf %40, %43 : vector<8x32xf32>
    %45 = arith.addf %42, %44 : vector<8x32xf32>
    %46 = vector.extract_strided_slice %45 {offsets = [0, 0], sizes = [2, 32], strides = [1, 1]} : vector<8x32xf32> to vector<2x32xf32>
    %c2 = arith.constant 2 : index
    %c0_25 = arith.constant 0 : index
    %c0_26 = arith.constant 0 : index
    %47 = vector.load %arg4[%c2, %c0_25, %c0_26] : memref<8x2x32xf32, #tpu.memory_space<vmem>>, vector<1x2x32xf32>
    %48 = vector.shape_cast %47 : vector<1x2x32xf32> to vector<2x32xf32>
    %49 = vector.shape_cast %46 : vector<2x32xf32> to vector<1x2x32xf32>
    tpu.vector_store %arg4[%c2, %c0_25, %c0_26], %49 {strides = array<i32>} : memref<8x2x32xf32, #tpu.memory_space<vmem>>, vector<1x2x32xf32>,
    %50 = vector.extract_strided_slice %5 {offsets = [24, 0], sizes = [8, 32], strides = [1, 1]} : vector<64x32xf32> to vector<8x32xf32>
    %cst_27 = arith.constant dense<0.000000e+00> : vector<8x32xf32>
    %51 = tpu.matmul %45, %6, %cst_27 {dimension_numbers = #tpu.dot_dimension_numbers<[1], [0], [0], [1], [0, 0, 1, 1], [], []>} : vector<8x32xf32>, vector<32x32xf32>, vector<8x32xf32> -> vector<8x32xf32>
    %52 = arith.addf %50, %51 : vector<8x32xf32>
    %cst_28 = arith.constant 0.000000e+00 : f32
    %53 = vector.broadcast %cst_28 : f32 to vector<8x32xf32>
    %54 = arith.maximumf %52, %53 : vector<8x32xf32>
    %cst_29 = arith.constant 8.000000e-01 : f32
    %55 = vector.broadcast %cst_29 : f32 to vector<8x32xf32>
    %56 = arith.mulf %45, %55 : vector<8x32xf32>
    %cst_30 = arith.constant 2.000000e-01 : f32
    %57 = vector.broadcast %cst_30 : f32 to vector<8x32xf32>
    %58 = arith.mulf %54, %57 : vector<8x32xf32>
    %59 = arith.addf %56, %58 : vector<8x32xf32>
    %60 = vector.extract_strided_slice %59 {offsets = [0, 0], sizes = [2, 32], strides = [1, 1]} : vector<8x32xf32> to vector<2x32xf32>
    %c3 = arith.constant 3 : index
    %c0_31 = arith.constant 0 : index
    %c0_32 = arith.constant 0 : index
    %61 = vector.load %arg4[%c3, %c0_31, %c0_32] : memref<8x2x32xf32, #tpu.memory_space<vmem>>, vector<1x2x32xf32>
    %62 = vector.shape_cast %61 : vector<1x2x32xf32> to vector<2x32xf32>
    %63 = vector.shape_cast %60 : vector<2x32xf32> to vector<1x2x32xf32>
    tpu.vector_store %arg4[%c3, %c0_31, %c0_32], %63 {strides = array<i32>} : memref<8x2x32xf32, #tpu.memory_space<vmem>>, vector<1x2x32xf32>,
    %64 = vector.extract_strided_slice %5 {offsets = [32, 0], sizes = [8, 32], strides = [1, 1]} : vector<64x32xf32> to vector<8x32xf32>
    %cst_33 = arith.constant dense<0.000000e+00> : vector<8x32xf32>
    %65 = tpu.matmul %59, %6, %cst_33 {dimension_numbers = #tpu.dot_dimension_numbers<[1], [0], [0], [1], [0, 0, 1, 1], [], []>} : vector<8x32xf32>, vector<32x32xf32>, vector<8x32xf32> -> vector<8x32xf32>
    %66 = arith.addf %64, %65 : vector<8x32xf32>
    %cst_34 = arith.constant 0.000000e+00 : f32
    %67 = vector.broadcast %cst_34 : f32 to vector<8x32xf32>
    %68 = arith.maximumf %66, %67 : vector<8x32xf32>
    %cst_35 = arith.constant 8.000000e-01 : f32
    %69 = vector.broadcast %cst_35 : f32 to vector<8x32xf32>
    %70 = arith.mulf %59, %69 : vector<8x32xf32>
    %cst_36 = arith.constant 2.000000e-01 : f32
    %71 = vector.broadcast %cst_36 : f32 to vector<8x32xf32>
    %72 = arith.mulf %68, %71 : vector<8x32xf32>
    %73 = arith.addf %70, %72 : vector<8x32xf32>
    %74 = vector.extract_strided_slice %73 {offsets = [0, 0], sizes = [2, 32], strides = [1, 1]} : vector<8x32xf32> to vector<2x32xf32>
    %c4 = arith.constant 4 : index
    %c0_37 = arith.constant 0 : index
    %c0_38 = arith.constant 0 : index
    %75 = vector.load %arg4[%c4, %c0_37, %c0_38] : memref<8x2x32xf32, #tpu.memory_space<vmem>>, vector<1x2x32xf32>
    %76 = vector.shape_cast %75 : vector<1x2x32xf32> to vector<2x32xf32>
    %77 = vector.shape_cast %74 : vector<2x32xf32> to vector<1x2x32xf32>
    tpu.vector_store %arg4[%c4, %c0_37, %c0_38], %77 {strides = array<i32>} : memref<8x2x32xf32, #tpu.memory_space<vmem>>, vector<1x2x32xf32>,
    %78 = vector.extract_strided_slice %5 {offsets = [40, 0], sizes = [8, 32], strides = [1, 1]} : vector<64x32xf32> to vector<8x32xf32>
    %cst_39 = arith.constant dense<0.000000e+00> : vector<8x32xf32>
    %79 = tpu.matmul %73, %6, %cst_39 {dimension_numbers = #tpu.dot_dimension_numbers<[1], [0], [0], [1], [0, 0, 1, 1], [], []>} : vector<8x32xf32>, vector<32x32xf32>, vector<8x32xf32> -> vector<8x32xf32>
    %80 = arith.addf %78, %79 : vector<8x32xf32>
    %cst_40 = arith.constant 0.000000e+00 : f32
    %81 = vector.broadcast %cst_40 : f32 to vector<8x32xf32>
    %82 = arith.maximumf %80, %81 : vector<8x32xf32>
    %cst_41 = arith.constant 8.000000e-01 : f32
    %83 = vector.broadcast %cst_41 : f32 to vector<8x32xf32>
    %84 = arith.mulf %73, %83 : vector<8x32xf32>
    %cst_42 = arith.constant 2.000000e-01 : f32
    %85 = vector.broadcast %cst_42 : f32 to vector<8x32xf32>
    %86 = arith.mulf %82, %85 : vector<8x32xf32>
    %87 = arith.addf %84, %86 : vector<8x32xf32>
    %88 = vector.extract_strided_slice %87 {offsets = [0, 0], sizes = [2, 32], strides = [1, 1]} : vector<8x32xf32> to vector<2x32xf32>
    %c5 = arith.constant 5 : index
    %c0_43 = arith.constant 0 : index
    %c0_44 = arith.constant 0 : index
    %89 = vector.load %arg4[%c5, %c0_43, %c0_44] : memref<8x2x32xf32, #tpu.memory_space<vmem>>, vector<1x2x32xf32>
    %90 = vector.shape_cast %89 : vector<1x2x32xf32> to vector<2x32xf32>
    %91 = vector.shape_cast %88 : vector<2x32xf32> to vector<1x2x32xf32>
    tpu.vector_store %arg4[%c5, %c0_43, %c0_44], %91 {strides = array<i32>} : memref<8x2x32xf32, #tpu.memory_space<vmem>>, vector<1x2x32xf32>,
    %92 = vector.extract_strided_slice %5 {offsets = [48, 0], sizes = [8, 32], strides = [1, 1]} : vector<64x32xf32> to vector<8x32xf32>
    %cst_45 = arith.constant dense<0.000000e+00> : vector<8x32xf32>
    %93 = tpu.matmul %87, %6, %cst_45 {dimension_numbers = #tpu.dot_dimension_numbers<[1], [0], [0], [1], [0, 0, 1, 1], [], []>} : vector<8x32xf32>, vector<32x32xf32>, vector<8x32xf32> -> vector<8x32xf32>
    %94 = arith.addf %92, %93 : vector<8x32xf32>
    %cst_46 = arith.constant 0.000000e+00 : f32
    %95 = vector.broadcast %cst_46 : f32 to vector<8x32xf32>
    %96 = arith.maximumf %94, %95 : vector<8x32xf32>
    %cst_47 = arith.constant 8.000000e-01 : f32
    %97 = vector.broadcast %cst_47 : f32 to vector<8x32xf32>
    %98 = arith.mulf %87, %97 : vector<8x32xf32>
    %cst_48 = arith.constant 2.000000e-01 : f32
    %99 = vector.broadcast %cst_48 : f32 to vector<8x32xf32>
    %100 = arith.mulf %96, %99 : vector<8x32xf32>
    %101 = arith.addf %98, %100 : vector<8x32xf32>
    %102 = vector.extract_strided_slice %101 {offsets = [0, 0], sizes = [2, 32], strides = [1, 1]} : vector<8x32xf32> to vector<2x32xf32>
    %c6 = arith.constant 6 : index
    %c0_49 = arith.constant 0 : index
    %c0_50 = arith.constant 0 : index
    %103 = vector.load %arg4[%c6, %c0_49, %c0_50] : memref<8x2x32xf32, #tpu.memory_space<vmem>>, vector<1x2x32xf32>
    %104 = vector.shape_cast %103 : vector<1x2x32xf32> to vector<2x32xf32>
    %105 = vector.shape_cast %102 : vector<2x32xf32> to vector<1x2x32xf32>
    tpu.vector_store %arg4[%c6, %c0_49, %c0_50], %105 {strides = array<i32>} : memref<8x2x32xf32, #tpu.memory_space<vmem>>, vector<1x2x32xf32>,
    %106 = vector.extract_strided_slice %5 {offsets = [56, 0], sizes = [8, 32], strides = [1, 1]} : vector<64x32xf32> to vector<8x32xf32>
    %cst_51 = arith.constant dense<0.000000e+00> : vector<8x32xf32>
    %107 = tpu.matmul %101, %6, %cst_51 {dimension_numbers = #tpu.dot_dimension_numbers<[1], [0], [0], [1], [0, 0, 1, 1], [], []>} : vector<8x32xf32>, vector<32x32xf32>, vector<8x32xf32> -> vector<8x32xf32>
    %108 = arith.addf %106, %107 : vector<8x32xf32>
    %cst_52 = arith.constant 0.000000e+00 : f32
    %109 = vector.broadcast %cst_52 : f32 to vector<8x32xf32>
    %110 = arith.maximumf %108, %109 : vector<8x32xf32>
    %cst_53 = arith.constant 8.000000e-01 : f32
    %111 = vector.broadcast %cst_53 : f32 to vector<8x32xf32>
    %112 = arith.mulf %101, %111 : vector<8x32xf32>
    %cst_54 = arith.constant 2.000000e-01 : f32
    %113 = vector.broadcast %cst_54 : f32 to vector<8x32xf32>
    %114 = arith.mulf %110, %113 : vector<8x32xf32>
    %115 = arith.addf %112, %114 : vector<8x32xf32>
    %116 = vector.extract_strided_slice %115 {offsets = [0, 0], sizes = [2, 32], strides = [1, 1]} : vector<8x32xf32> to vector<2x32xf32>
    %c7 = arith.constant 7 : index
    %c0_55 = arith.constant 0 : index
    %c0_56 = arith.constant 0 : index
    %117 = vector.load %arg4[%c7, %c0_55, %c0_56] : memref<8x2x32xf32, #tpu.memory_space<vmem>>, vector<1x2x32xf32>
    %118 = vector.shape_cast %117 : vector<1x2x32xf32> to vector<2x32xf32>
    %119 = vector.shape_cast %116 : vector<2x32xf32> to vector<1x2x32xf32>
    tpu.vector_store %arg4[%c7, %c0_55, %c0_56], %119 {strides = array<i32>} : memref<8x2x32xf32, #tpu.memory_space<vmem>>, vector<1x2x32xf32>,
    %120 = vector.extract_strided_slice %115 {offsets = [0, 0], sizes = [2, 32], strides = [1, 1]} : vector<8x32xf32> to vector<2x32xf32>
    %c0_57 = arith.constant 0 : index
    %c0_58 = arith.constant 0 : index
    %121 = vector.load %arg5[%c0_57, %c0_58] : memref<2x32xf32, #tpu.memory_space<vmem>>, vector<2x32xf32>
    tpu.vector_store %arg5[%c0_57, %c0_58], %120 {strides = array<i32>} : memref<2x32xf32, #tpu.memory_space<vmem>>, vector<2x32xf32>,
    return
  }
}

</mosaic_0001>

<llo_original>
// kernel: _ctrnn_forward_impl.1
$region0: #{_ctrnn_forward_impl.1}
  #allocation0 [shape = 'u32[]', space=smem, size = 0x4, offset = 0x4, fixed_abs, tag = 'smem constant byte address 0x4 - core index']
  #allocation1 [shape = 'u32[72,128]{1,0:T(1,128)}', space=vmem, size = 0x9000, scoped, tag = 'internal scratch']
  %s0 = inlined_call_operand.vmem [shape: f32[64,4], index: 0, kind: input, shape index: {}]
  %s1 = inlined_call_operand.vmem [shape: f32[4,32], index: 1, kind: input, shape index: {}]
  %s2 = inlined_call_operand.vmem [shape: f32[32,32], index: 2, kind: input, shape index: {}]
  %s3 = inlined_call_operand.vmem [shape: f32[1,32], index: 3, kind: input, shape index: {}]
  %s4 = inlined_call_operand.hbm [shape: f32[8,2,32], index: 4, kind: output, shape index: {0}]
  %s5 = inlined_call_operand.hbm [shape: f32[2,32], index: 5, kind: output, shape index: {1}]
  %6 = xla_tuple %s4, %s5
  %s7 = sld [smem:[#allocation0]]
  $region34: #{_ctrnn_forward_impl.1} parent=0
    _
  %s9 = ssub.s32 1, %s7
  %s10 = scalar_select 0, %s9, %s7
  $region1: #{_ctrnn_forward_impl.1} parent=0
    #allocation2 [shape = 'u8[8192]{0}', space=vmem, size = 0x2000, scoped, tag = 'output window, operand 0, single buffered']
    #allocation3 [shape = 's32[1]{0}', space=sflag, size = 0x4, scoped, tag = 'scoped memory for _ctrnn_forward_impl.1']
    #allocation4 [shape = 'u8[1024]{0}', space=vmem, size = 0x400, scoped, tag = 'output window, operand 1, single buffered']
    #allocation5 [shape = 's32[1]{0}', space=sflag, size = 0x4, scoped, tag = 'scoped memory for _ctrnn_forward_impl.1']
    %11 = vsyncpa [#allocation3], 0
    %12 = vsyncpa [#allocation5], 0
    // Predicated region
    $region2: #{_ctrnn_forward_impl.1} parent=1 // pred_check
      _
    $region3: #{_ctrnn_forward_impl.1} parent=1 // pred_check_branch
      %14 = sbr.rel (0) target = $region5
    $region4: #{_ctrnn_forward_impl.1} parent=1 // pred_region
      _
    $region5: #{_ctrnn_forward_impl.1} parent=1 // pred_fallthru
      _
    // Predicated region
    $region6: #{_ctrnn_forward_impl.1} parent=1 // pred_check
      _
    $region7: #{_ctrnn_forward_impl.1} parent=1 // pred_check_branch
      %16 = sbr.rel (0) target = $region9
    $region8: #{_ctrnn_forward_impl.1} parent=1 // pred_region
      _
    $region9: #{_ctrnn_forward_impl.1} parent=1 // pred_fallthru
      _
    // Predicated region
    $region10: #{_ctrnn_forward_impl.1} parent=1 // pred_check
      _
    $region11: #{_ctrnn_forward_impl.1} parent=1 // pred_check_branch
      %18 = sbr.rel (0) target = $region13
    $region12: #{_ctrnn_forward_impl.1} parent=1 // pred_region
      _
    $region13: #{_ctrnn_forward_impl.1} parent=1 // pred_fallthru
      _
    // Predicated region
    $region14: #{_ctrnn_forward_impl.1} parent=1 // pred_check
      _
    $region15: #{_ctrnn_forward_impl.1} parent=1 // pred_check_branch
      %20 = sbr.rel (0) target = $region17
    $region16: #{_ctrnn_forward_impl.1} parent=1 // pred_region
      _
    $region17: #{_ctrnn_forward_impl.1} parent=1 // pred_fallthru
      _
    %v21 = vld [vmem:[%s0] sm:$0xff]
    %v22 = vld [vmem:[%s0 + $0x8] sm:$0xff]
    %v23 = vld [vmem:[%s0 + $0x10] sm:$0xff]
    %v24 = vld [vmem:[%s0 + $0x18] sm:$0xff]
    %v25 = vld [vmem:[%s0 + $0x20] sm:$0xff]
    %v26 = vld [vmem:[%s0 + $0x28] sm:$0xff]
    %v27 = vld [vmem:[%s0 + $0x30] sm:$0xff]
    %v28 = vld [vmem:[%s0 + $0x38] sm:$0xff]
    %v29 = vld [vmem:[%s1] sm:$0xf]
    %v30 = vld [vmem:[%s3] sm:$0x1]
    %v32 = vperm.slane %v30, 0
    %vm34 = vcmask 31744
    %v36 = vsel %vm34, %v21, 0
    %v39 = vsel %vm34, %v22, 0
    %v42 = vsel %vm34, %v23, 0
    %v45 = vsel %vm34, %v24, 0
    %v48 = vsel %vm34, %v25, 0
    %v51 = vsel %vm34, %v26, 0
    %v54 = vsel %vm34, %v27, 0
    %v57 = vsel %vm34, %v28, 0
    %vm59 = vcmask 1043456
    %v61 = vsel %vm59, %v29, 0
    %63 = vmatpush.msra.mxu0 0.0
    %64 = vmatpush.msra.mxu0 0.0
    %65 = vmatpush.msra.mxu0 0.0
    %66 = vmatpush.msra.mxu0 0.0
    %67 = vmatpush.msra.mxu0 0.0
    %68 = vmatpush.msra.mxu0 0.0
    %69 = vmatpush.msra.mxu0 0.0
    %70 = vmatpush.msra.mxu0 0.0
    %71 = vmatpush.msra.mxu0 0.0
    %72 = vmatpush.msra.mxu0 0.0
    %73 = vmatpush.msra.mxu0 0.0
    %74 = vmatpush.msra.mxu0 0.0
    %75 = vmatpush.msra.mxu0 0.0
    %76 = vmatpush.msra.mxu0 0.0
    %77 = vmatpush.msra.mxu0 0.0
    %78 = vmatpush.msra.mxu0 %v61
    %79 = vmatmul.f32.gmra.mxu0 %v36
    %v80 = vpop.f32.mrf.mxu0
    %v81 = vadd.f32 %v32, %v80
    %82 = vmatmul.f32.gmra.mxu0 %v39
    %v83 = vpop.f32.mrf.mxu0
    %v84 = vadd.f32 %v32, %v83
    %85 = vmatmul.f32.gmra.mxu0 %v42
    %v86 = vpop.f32.mrf.mxu0
    %v87 = vadd.f32 %v32, %v86
    %88 = vmatmul.f32.gmra.mxu0 %v45
    %v89 = vpop.f32.mrf.mxu0
    %v90 = vadd.f32 %v32, %v89
    %91 = vmatmul.f32.gmra.mxu0 %v48
    %v92 = vpop.f32.mrf.mxu0
    %v93 = vadd.f32 %v32, %v92
    %94 = vmatmul.f32.gmra.mxu0 %v51
    %v95 = vpop.f32.mrf.mxu0
    %v96 = vadd.f32 %v32, %v95
    %97 = vmatmul.f32.gmra.mxu0 %v54
    %v98 = vpop.f32.mrf.mxu0
    %v99 = vadd.f32 %v32, %v98
    %100 = vmatmul.f32.gmra.mxu0 %v57
    %v101 = vpop.f32.mrf.mxu0
    %v102 = vadd.f32 %v32, %v101
    %103 = vdwg.mxu0
    %v104 = vld [vmem:[%s2] sm:$0xff]
    %v105 = vld [vmem:[%s2 + $0x8] sm:$0xff]
    %v106 = vld [vmem:[%s2 + $0x10] sm:$0xff]
    %v107 = vld [vmem:[%s2 + $0x18] sm:$0xff]
    %vm108 = vcmask 261120
    %v110 = vsel %vm108, 0.0, 0
    %112 = vmatpush.msra.mxu0 0.0
    %113 = vmatpush.msra.mxu0 0.0
    %114 = vmatpush.msra.mxu0 0.0
    %115 = vmatpush.msra.mxu0 0.0
    %116 = vmatpush.msra.mxu0 0.0
    %117 = vmatpush.msra.mxu0 0.0
    %118 = vmatpush.msra.mxu0 0.0
    %119 = vmatpush.msra.mxu0 0.0
    %120 = vmatpush.msra.mxu0 0.0
    %121 = vmatpush.msra.mxu0 0.0
    %122 = vmatpush.msra.mxu0 0.0
    %123 = vmatpush.msra.mxu0 0.0
    %124 = vmatpush.msra.mxu0 %v107
    %125 = vmatpush.msra.mxu0 %v106
    %126 = vmatpush.msra.mxu0 %v105
    %127 = vmatpush.msra.mxu0 %v104
    %128 = vmatmul.f32.gmra.mxu0 %v110
    %v129 = vpop.f32.mrf.mxu0
    %v130 = vadd.f32 0.0, %v129
    %131 = vdwg.mxu0
    %v132 = vadd.f32 %v81, %v130
    %v133 = vmax.f32 %v132, 0.0
    %v134 = vmul.f32 %v133, 0.2
    %v135 = vadd.f32 %v134, 0.0
    %vm136 = vcmask 254976
    %137 = vst.msk [vmem:[#allocation2] sm:$0x3] %vm136, %v135
    %v139 = vsel %vm108, %v135, 0
    %141 = vmatpush.msra.mxu0 0.0
    %142 = vmatpush.msra.mxu0 0.0
    %143 = vmatpush.msra.mxu0 0.0
    %144 = vmatpush.msra.mxu0 0.0
    %145 = vmatpush.msra.mxu0 0.0
    %146 = vmatpush.msra.mxu0 0.0
    %147 = vmatpush.msra.mxu0 0.0
    %148 = vmatpush.msra.mxu0 0.0
    %149 = vmatpush.msra.mxu0 0.0
    %150 = vmatpush.msra.mxu0 0.0
    %151 = vmatpush.msra.mxu0 0.0
    %152 = vmatpush.msra.mxu0 0.0
    %153 = vmatpush.msra.mxu0 %v107
    %154 = vmatpush.msra.mxu0 %v106
    %155 = vmatpush.msra.mxu0 %v105
    %156 = vmatpush.msra.mxu0 %v104
    %157 = vmatmul.f32.gmra.mxu0 %v139
    %v158 = vpop.f32.mrf.mxu0
    %v159 = vadd.f32 0.0, %v158
    %160 = vdwg.mxu0
    %v161 = vadd.f32 %v84, %v159
    %v162 = vmax.f32 %v161, 0.0
    %v163 = vmul.f32 %v135, 0.8
    %v164 = vmul.f32 %v162, 0.2
    %v165 = vadd.f32 %v163, %v164
    %s166 = scalar_lea.vmem [#allocation2], 2
    %167 = vst.msk [vmem:[%s166] sm:$0x3] %vm136, %v165
    %v169 = vsel %vm108, %v165, 0
    %171 = vmatpush.msra.mxu0 0.0
    %172 = vmatpush.msra.mxu0 0.0
    %173 = vmatpush.msra.mxu0 0.0
    %174 = vmatpush.msra.mxu0 0.0
    %175 = vmatpush.msra.mxu0 0.0
    %176 = vmatpush.msra.mxu0 0.0
    %177 = vmatpush.msra.mxu0 0.0
    %178 = vmatpush.msra.mxu0 0.0
    %179 = vmatpush.msra.mxu0 0.0
    %180 = vmatpush.msra.mxu0 0.0
    %181 = vmatpush.msra.mxu0 0.0
    %182 = vmatpush.msra.mxu0 0.0
    %183 = vmatpush.msra.mxu0 %v107
    %184 = vmatpush.msra.mxu0 %v106
    %185 = vmatpush.msra.mxu0 %v105
    %186 = vmatpush.msra.mxu0 %v104
    %187 = vmatmul.f32.gmra.mxu0 %v169
    %v188 = vpop.f32.mrf.mxu0
    %v189 = vadd.f32 0.0, %v188
    %190 = vdwg.mxu0
    %v191 = vadd.f32 %v87, %v189
    %v192 = vmax.f32 %v191, 0.0
    %v193 = vmul.f32 %v165, 0.8
    %v194 = vmul.f32 %v192, 0.2
    %v195 = vadd.f32 %v193, %v194
    %s196 = scalar_lea.vmem [#allocation2], 4
    %197 = vst.msk [vmem:[%s196] sm:$0x3] %vm136, %v195
    %v199 = vsel %vm108, %v195, 0
    %201 = vmatpush.msra.mxu0 0.0
    %202 = vmatpush.msra.mxu0 0.0
    %203 = vmatpush.msra.mxu0 0.0
    %204 = vmatpush.msra.mxu0 0.0
    %205 = vmatpush.msra.mxu0 0.0
    %206 = vmatpush.msra.mxu0 0.0
    %207 = vmatpush.msra.mxu0 0.0
    %208 = vmatpush.msra.mxu0 0.0
    %209 = vmatpush.msra.mxu0 0.0
    %210 = vmatpush.msra.mxu0 0.0
    %211 = vmatpush.msra.mxu0 0.0
    %212 = vmatpush.msra.mxu0 0.0
    %213 = vmatpush.msra.mxu0 %v107
    %214 = vmatpush.msra.mxu0 %v106
    %215 = vmatpush.msra.mxu0 %v105
    %216 = vmatpush.msra.mxu0 %v104
    %217 = vmatmul.f32.gmra.mxu0 %v199
    %v218 = vpop.f32.mrf.mxu0
    %v219 = vadd.f32 0.0, %v218
    %220 = vdwg.mxu0
    %v221 = vadd.f32 %v90, %v219
    %v222 = vmax.f32 %v221, 0.0
    %v223 = vmul.f32 %v195, 0.8
    %v224 = vmul.f32 %v222, 0.2
    %v225 = vadd.f32 %v223, %v224
    %s226 = scalar_lea.vmem [#allocation2], 6
    %227 = vst.msk [vmem:[%s226] sm:$0x3] %vm136, %v225
    %v229 = vsel %vm108, %v225, 0
    %231 = vmatpush.msra.mxu0 0.0
    %232 = vmatpush.msra.mxu0 0.0
    %233 = vmatpush.msra.mxu0 0.0
    %234 = vmatpush.msra.mxu0 0.0
    %235 = vmatpush.msra.mxu0 0.0
    %236 = vmatpush.msra.mxu0 0.0
    %237 = vmatpush.msra.mxu0 0.0
    %238 = vmatpush.msra.mxu0 0.0
    %239 = vmatpush.msra.mxu0 0.0
    %240 = vmatpush.msra.mxu0 0.0
    %241 = vmatpush.msra.mxu0 0.0
    %242 = vmatpush.msra.mxu0 0.0
    %243 = vmatpush.msra.mxu0 %v107
    %244 = vmatpush.msra.mxu0 %v106
    %245 = vmatpush.msra.mxu0 %v105
    %246 = vmatpush.msra.mxu0 %v104
    %247 = vmatmul.f32.gmra.mxu0 %v229
    %v248 = vpop.f32.mrf.mxu0
    %v249 = vadd.f32 0.0, %v248
    %250 = vdwg.mxu0
    %v251 = vadd.f32 %v93, %v249
    %v252 = vmax.f32 %v251, 0.0
    %v253 = vmul.f32 %v225, 0.8
    %v254 = vmul.f32 %v252, 0.2
    %v255 = vadd.f32 %v253, %v254
    %s256 = scalar_lea.vmem [#allocation2], 8
    %257 = vst.msk [vmem:[%s256] sm:$0x3] %vm136, %v255
    %v259 = vsel %vm108, %v255, 0
    %261 = vmatpush.msra.mxu0 0.0
    %262 = vmatpush.msra.mxu0 0.0
    %263 = vmatpush.msra.mxu0 0.0
    %264 = vmatpush.msra.mxu0 0.0
    %265 = vmatpush.msra.mxu0 0.0
    %266 = vmatpush.msra.mxu0 0.0
    %267 = vmatpush.msra.mxu0 0.0
    %268 = vmatpush.msra.mxu0 0.0
    %269 = vmatpush.msra.mxu0 0.0
    %270 = vmatpush.msra.mxu0 0.0
    %271 = vmatpush.msra.mxu0 0.0
    %272 = vmatpush.msra.mxu0 0.0
    %273 = vmatpush.msra.mxu0 %v107
    %274 = vmatpush.msra.mxu0 %v106
    %275 = vmatpush.msra.mxu0 %v105
    %276 = vmatpush.msra.mxu0 %v104
    %277 = vmatmul.f32.gmra.mxu0 %v259
    %v278 = vpop.f32.mrf.mxu0
    %v279 = vadd.f32 0.0, %v278
    %280 = vdwg.mxu0
    %v281 = vadd.f32 %v96, %v279
    %v282 = vmax.f32 %v281, 0.0
    %v283 = vmul.f32 %v255, 0.8
    %v284 = vmul.f32 %v282, 0.2
    %v285 = vadd.f32 %v283, %v284
    %s286 = scalar_lea.vmem [#allocation2], 10
    %287 = vst.msk [vmem:[%s286] sm:$0x3] %vm136, %v285
    %v289 = vsel %vm108, %v285, 0
    %291 = vmatpush.msra.mxu0 0.0
    %292 = vmatpush.msra.mxu0 0.0
    %293 = vmatpush.msra.mxu0 0.0
    %294 = vmatpush.msra.mxu0 0.0
    %295 = vmatpush.msra.mxu0 0.0
    %296 = vmatpush.msra.mxu0 0.0
    %297 = vmatpush.msra.mxu0 0.0
    %298 = vmatpush.msra.mxu0 0.0
    %299 = vmatpush.msra.mxu0 0.0
    %300 = vmatpush.msra.mxu0 0.0
    %301 = vmatpush.msra.mxu0 0.0
    %302 = vmatpush.msra.mxu0 0.0
    %303 = vmatpush.msra.mxu0 %v107
    %304 = vmatpush.msra.mxu0 %v106
    %305 = vmatpush.msra.mxu0 %v105
    %306 = vmatpush.msra.mxu0 %v104
    %307 = vmatmul.f32.gmra.mxu0 %v289
    %v308 = vpop.f32.mrf.mxu0
    %v309 = vadd.f32 0.0, %v308
    %310 = vdwg.mxu0
    %v311 = vadd.f32 %v99, %v309
    %v312 = vmax.f32 %v311, 0.0
    %v313 = vmul.f32 %v285, 0.8
    %v314 = vmul.f32 %v312, 0.2
    %v315 = vadd.f32 %v313, %v314
    %s316 = scalar_lea.vmem [#allocation2], 12
    %317 = vst.msk [vmem:[%s316] sm:$0x3] %vm136, %v315
    %v319 = vsel %vm108, %v315, 0
    %321 = vmatpush.msra.mxu0 0.0
    %322 = vmatpush.msra.mxu0 0.0
    %323 = vmatpush.msra.mxu0 0.0
    %324 = vmatpush.msra.mxu0 0.0
    %325 = vmatpush.msra.mxu0 0.0
    %326 = vmatpush.msra.mxu0 0.0
    %327 = vmatpush.msra.mxu0 0.0
    %328 = vmatpush.msra.mxu0 0.0
    %329 = vmatpush.msra.mxu0 0.0
    %330 = vmatpush.msra.mxu0 0.0
    %331 = vmatpush.msra.mxu0 0.0
    %332 = vmatpush.msra.mxu0 0.0
    %333 = vmatpush.msra.mxu0 %v107
    %334 = vmatpush.msra.mxu0 %v106
    %335 = vmatpush.msra.mxu0 %v105
    %336 = vmatpush.msra.mxu0 %v104
    %337 = vmatmul.f32.gmra.mxu0 %v319
    %v338 = vpop.f32.mrf.mxu0
    %v339 = vadd.f32 0.0, %v338
    %340 = vdwg.mxu0
    %v341 = vadd.f32 %v102, %v339
    %v342 = vmax.f32 %v341, 0.0
    %v343 = vmul.f32 %v315, 0.8
    %v344 = vmul.f32 %v342, 0.2
    %v345 = vadd.f32 %v343, %v344
    %s346 = scalar_lea.vmem [#allocation2], 14
    %347 = vst.msk [vmem:[%s346] sm:$0x3] %vm136, %v345
    %348 = vst.msk [vmem:[#allocation4] sm:$0x3] %vm136, %v345
    // Predicated region
    $region18: #{_ctrnn_forward_impl.1} parent=1 // pred_check
      _
    $region19: #{_ctrnn_forward_impl.1} parent=1 // pred_check_branch
      %350 = sbr.rel (0) target = $region21
    $region20: #{_ctrnn_forward_impl.1} parent=1 // pred_region
      %352 = vsyncadd [#allocation3], 0
      %s353 = sshll.u32 [#allocation2], 4
      %s354 = int_to_ptr.vmem [resolvable:$true] %s353
      %s355 = sshll.u32 %s4, 4
      %s356 = int_to_ptr.hbm [resolvable:$true] %s355
      %361 = dma.vmem_to_hbm [thread:$0]  %s354, 256, %s356, [#allocation3], 32, 32, 2
    $region21: #{_ctrnn_forward_impl.1} parent=1 // pred_fallthru
      _
    // Predicated region
    $region22: #{_ctrnn_forward_impl.1} parent=1 // pred_check
      _
    $region23: #{_ctrnn_forward_impl.1} parent=1 // pred_check_branch
      %363 = sbr.rel (0) target = $region25
    $region24: #{_ctrnn_forward_impl.1} parent=1 // pred_region
      %365 = vsyncadd [#allocation5], 0
      %s367 = sshll.u32 [#allocation4], 4
      %s368 = int_to_ptr.vmem [resolvable:$true] %s367
      %s369 = sshll.u32 %s5, 4
      %s370 = int_to_ptr.hbm [resolvable:$true] %s369
      %372 = dma.vmem_to_hbm [thread:$0]  %s368, 32, %s370, [#allocation5]
    $region25: #{_ctrnn_forward_impl.1} parent=1 // pred_fallthru
      _
    // Predicated region
    $region26: #{_ctrnn_forward_impl.1} parent=1 // pred_check
      _
    $region27: #{_ctrnn_forward_impl.1} parent=1 // pred_check_branch
      %374 = sbr.rel (0) target = $region29
    $region28: #{_ctrnn_forward_impl.1} parent=1 // pred_region
      %376 = dma.done [#allocation3], 256
    $region29: #{_ctrnn_forward_impl.1} parent=1 // pred_fallthru
      _
    // Predicated region
    $region30: #{_ctrnn_forward_impl.1} parent=1 // pred_check
      _
    $region31: #{_ctrnn_forward_impl.1} parent=1 // pred_check_branch
      %378 = sbr.rel (0) target = $region33
    $region32: #{_ctrnn_forward_impl.1} parent=1 // pred_region
      %380 = dma.done [#allocation5], 32
    $region33: #{_ctrnn_forward_impl.1} parent=1 // pred_fallthru
      _
    %381 = vsyncpa [#allocation3], 1
    %382 = vsyncpa [#allocation5], 1

</llo_original>
